<compile_context>
chip_gen: v6e
topology: v6e:2x2x1
jax: 0.10.0
libtpu: 0.0.40
codegen_flags: <defaults>
</compile_context>

<pallas_src>
import jax
import jax.numpy as jnp
from jax import lax
from jax.experimental import pallas as pl
from jax.experimental.pallas import tpu as pltpu

_HIDDEN = 10       # fc1 output / fc2 input width of the PyTorch module
_HIDDEN_PAD = 128  # padded to one full lane granule (free: (tb, 10) already
                   # occupies 128 lanes in VMEM; weights are resident)


def mlp_kernel(x_ref, w1_ref, b1_ref, w2_ref, b2_ref, o_ref):
    # fc1 on the MXU: (TB, H) @ (H, 128), bf16 inputs, f32 accumulation.
    h = jnp.dot(x_ref[...], w1_ref[...], preferred_element_type=jnp.float32)
    # bias + ReLU in f32 on the VPU (padded hidden columns stay exactly zero:
    # relu(0 + 0) = 0, so they contribute nothing to fc2).
    h = jnp.maximum(h + b1_ref[...], 0.0)
    # fc2: contract the 128-wide (padded) hidden axis of h against the (1,128)
    # fc2 weight row -> (1, TB): batch ends up on lanes, so the stores and the
    # output DMA are dense. h is cast to the weight dtype (bf16) so the MXU
    # takes a single pass per row slab; accumulation stays f32.
    out_row = lax.dot_general(
        w2_ref[...], h.astype(w2_ref.dtype),
        dimension_numbers=(((1,), (1,)), ((), ())),
        preferred_element_type=jnp.float32,
    )
    # b2 is a (1,1) f32 scalar in SMEM: exact scalar broadcast add in f32.
    o_ref[...] = (out_row + b2_ref[0, 0]).astype(o_ref.dtype)


def _round_up(x, m):
    return (x + m - 1) // m * m


def _pick_tb(B, H, x_itemsize, *, vmem_budget_bytes=16 * 1024 * 1024,
             max_tb=32768, min_tiles=2):
    """Batch-tile size from the true (lane-padded) per-step VMEM footprint.

    Per grid step (tb rows):
      x block, double-buffered        : 2 * tb * roundup(H,128) * x_itemsize
      h f32 + h bf16 temporaries      : tb * 128 * (4 + 2)
      fc2 relayout/result temporaries : tb * 128 * 4   (upper bound)
      (1, tb) f32 out block, 2 bufs   : 2 * tb * 8 * 4 (sublane-padded 1 -> 8)
    The 16 MiB default budget keeps the kernel inside the 32 MiB default-scoped
    VMEM on every generation, including v7x. Raise vmem_budget_bytes (plus
    CompilerParams(vmem_limit_bytes=...)) for slightly larger tiles on v5e/v6e.
    """
    lane = 128
    x_lanes = _round_up(H, lane)
    per_row = (2 * x_lanes * x_itemsize            # x double buffer
               + _HIDDEN_PAD * (4 + 2 + 4)         # h f32, h bf16, fc2 temps
               + 2 * 8 * 4)                        # (1, tb) out double buffer
    tb_cap = max(256, min(max_tb, vmem_budget_bytes // per_row // 256 * 256))
    # >= min_tiles grid steps so dimension_semantics=("parallel",) can spread
    # the batch across both v7x TensorCores, and tb is derived from B so the
    # padded tail stays < 256 * num_tiles rows (not a whole max-size tile).
    num_tiles = max(min_tiles, pl.cdiv(B, tb_cap))
    tb = _round_up(pl.cdiv(B, num_tiles), 256)
    return min(tb, tb_cap)


def net_forward(x, w1, b1, w2, b2, *, tb=None):
    """fc2(relu(fc1(x))) with params already in kernel layout (see prep_params).

    Returns (B, 1) float32, matching the PyTorch module's forward.
    """
    B, H = x.shape
    assert w1.shape == (H, _HIDDEN_PAD) and b1.shape == (1, _HIDDEN_PAD)
    assert w2.shape == (1, _HIDDEN_PAD) and b2.shape == (1, 1)

    if tb is None:
        tb = _pick_tb(B, H, jnp.dtype(x.dtype).itemsize)
    assert tb % 128 == 0  # 8-sublane-aligned x rows, 128-lane-dense out blocks

    B_pad = _round_up(B, tb)
    if B_pad != B:
        # Padded rows produce garbage outputs that are sliced off below; tb is
        # derived from B so the wasted DMA/compute on the tail stays small.
        x = jnp.pad(x, ((0, B_pad - B), (0, 0)))
    num_tiles = B_pad // tb

    out_row = pl.pallas_call(
        mlp_kernel,
        out_shape=jax.ShapeDtypeStruct((1, B_pad), jnp.float32),
        grid_spec=pltpu.PrefetchScalarGridSpec(
            num_scalar_prefetch=0,
            grid=(num_tiles,),
            in_specs=[
                pl.BlockSpec((tb, H), lambda i: (i, 0)),            # x: streamed
                pl.BlockSpec((H, _HIDDEN_PAD), lambda i: (0, 0)),   # w1: resident
                pl.BlockSpec((1, _HIDDEN_PAD), lambda i: (0, 0)),   # b1: resident
                pl.BlockSpec((1, _HIDDEN_PAD), lambda i: (0, 0)),   # w2: resident
                pl.BlockSpec(memory_space=pltpu.MemorySpace.SMEM),  # b2: scalar
            ],
            out_specs=pl.BlockSpec((1, tb), lambda i: (0, i)),      # lane-dense
        ),
        compiler_params=pltpu.CompilerParams(
            dimension_semantics=("parallel",),  # independent tiles -> v7x megacore
        ),
    )(x, w1, b1, w2, b2)

    # (1, B_pad) -> (B, 1). NOTE: on TPU this reshape is a lane->sublane
    # relayout inside XLA (not a free metadata op); it touches ~B*4 bytes,
    # negligible next to the x stream (H * itemsize bytes per row).
    return out_row.reshape(B_pad, 1)[:B]


def init_params(key, n_hidden):
    """PyTorch nn.Linear default init (U(-1/sqrt(fan_in), 1/sqrt(fan_in))), f32,
    in PyTorch-equivalent layout: w1 = fc1.weight.T (H,10), b1 (1,10),
    w2 = fc2.weight (1,10), b2 (1,1)."""
    k1, k2, k3, k4 = jax.random.split(key, 4)
    bound1 = 1.0 / jnp.sqrt(jnp.float32(n_hidden))
    w1 = jax.random.uniform(k1, (n_hidden, _HIDDEN), jnp.float32, -bound1, bound1)
    b1 = jax.random.uniform(k2, (1, _HIDDEN), jnp.float32, -bound1, bound1)
    bound2 = 1.0 / jnp.sqrt(jnp.float32(_HIDDEN))
    w2 = jax.random.uniform(k3, (1, _HIDDEN), jnp.float32, -bound2, bound2)
    b2 = jax.random.uniform(k4, (1, 1), jnp.float32, -bound2, bound2)
    return w1, b1, w2, b2


def prep_params(w1, b1, w2, b2, *, stream_dtype=jnp.bfloat16):
    """f32 PyTorch-layout params -> resident kernel operands.

    MXU-feeding weights are cast to `stream_dtype` (bf16 = native MXU input on
    v6e/v7x); biases stay f32 and are added to f32 accumulators (exact). The
    hidden dim is zero-padded 10 -> 128. Pass stream_dtype=jnp.float32 (and
    f32 x) if exact-f32 parity with PyTorch is required.
    """
    pad = _HIDDEN_PAD - _HIDDEN
    w1p = jnp.pad(w1, ((0, 0), (0, pad))).astype(stream_dtype)
    b1p = jnp.pad(b1, ((0, 0), (0, pad))).astype(jnp.float32)
    w2p = jnp.pad(w2, ((0, 0), (0, pad))).astype(stream_dtype)
    return w1p, b1p, w2p, b2.astype(jnp.float32)


def _reference(x, w1, b1, w2, b2):
    # Plain f32 reference of the PyTorch module, HIGHEST precision so XLA does
    # not silently use bf16 MXU passes in the reference itself.
    h = jnp.maximum(jnp.dot(x, w1, precision=lax.Precision.HIGHEST) + b1, 0.0)
    return jnp.dot(h, w2.T, precision=lax.Precision.HIGHEST) + b2


if __name__ == "__main__":
    key = jax.random.PRNGKey(0)
    n_hidden = 32

    kp, kx1, kx2 = jax.random.split(key, 3)
    w1, b1, w2, b2 = init_params(kp, n_hidden)
    w1p, b1p, w2p, b2p = prep_params(w1, b1, w2, b2)

    # Reference uses the same bf16-rounded x / weights the kernel consumes, so
    # the only remaining mismatch is the kernel's bf16 h for fc2 (~1e-3 abs).
    def ref_from_bf16(x_bf):
        return _reference(x_bf.astype(jnp.float32),
                          w1p[:, :_HIDDEN].astype(jnp.float32), b1,
                          w2p[:, :_HIDDEN].astype(jnp.float32), b2)

    # Small batch: single tile, exercises the batch-padding path.
    batch = 8
    x = jax.random.normal(kx1, (batch, n_hidden), jnp.float32)
    x_bf = x.astype(jnp.bfloat16)   # cast at the caller / producer, not in-wrapper
    out = jax.block_until_ready(net_forward(x_bf, w1p, b1p, w2p, b2p))
    assert out.shape == (batch, 1)
    assert jnp.allclose(out, ref_from_bf16(x_bf), atol=1e-2, rtol=1e-2)

    # Larger ragged batch: auto tb -> 2 tiles (parallel grid axis) + padding.
    batch2 = 600
    x2 = jax.random.normal(kx2, (batch2, n_hidden), jnp.float32)
    x2_bf = x2.astype(jnp.bfloat16)
    out2 = jax.block_until_ready(net_forward(x2_bf, w1p, b1p, w2p, b2p))
    assert out2.shape == (batch2, 1)
    assert jnp.allclose(out2, ref_from_bf16(x2_bf), atol=1e-2, rtol=1e-2)

    # Explicit tile override (3 tiles of 256 rows) must match bit-for-bit.
    out3 = jax.block_until_ready(net_forward(x2_bf, w1p, b1p, w2p, b2p, tb=256))
    assert jnp.allclose(out3, out2, atol=1e-6, rtol=1e-6)

    print("KERNEL_OK")
</pallas_src>

<mosaic_0001>
module attributes {stable_mosaic.version = 11 : i64} {
  func.func @mlp_kernel(%arg0: i32, %arg1: memref<256x32xbf16, #tpu.memory_space<vmem>>, %arg2: memref<32x128xbf16, #tpu.memory_space<vmem>>, %arg3: memref<1x128xf32, #tpu.memory_space<vmem>>, %arg4: memref<1x128xbf16, #tpu.memory_space<vmem>>, %arg5: memref<1x1xf32, #tpu.memory_space<smem>>, %arg6: memref<1x256xf32, #tpu.memory_space<vmem>>) attributes {dimension_semantics = [#tpu.dimension_semantics<parallel>], iteration_bounds = array<i64: 1>, scalar_prefetch = 0 : i64, scratch_operands = 0 : i64, tpu.core_type = #tpu.core_type<tc>, window_params = [{transform_indices = @transform_0, window_bounds = array<i64: 256, 32>}, {pipeline_mode = #tpu.pipeline_mode<synchronous>, transform_indices = @transform_1, window_bounds = array<i64: 32, 128>}, {pipeline_mode = #tpu.pipeline_mode<synchronous>, transform_indices = @transform_2, window_bounds = array<i64: 1, 128>}, {pipeline_mode = #tpu.pipeline_mode<synchronous>, transform_indices = @transform_3, window_bounds = array<i64: 1, 128>}, {transform_indices = @transform_4, window_bounds = array<i64: 1, 1>}, {transform_indices = @transform_5, window_bounds = array<i64: 1, 256>}]} {
    %c0 = arith.constant 0 : index
    %c0_0 = arith.constant 0 : index
    %0 = vector.load %arg1[%c0, %c0_0] : memref<256x32xbf16, #tpu.memory_space<vmem>>, vector<256x32xbf16>
    %c0_1 = arith.constant 0 : index
    %c0_2 = arith.constant 0 : index
    %1 = vector.load %arg2[%c0_1, %c0_2] : memref<32x128xbf16, #tpu.memory_space<vmem>>, vector<32x128xbf16>
    %cst = arith.constant dense<0.000000e+00> : vector<256x128xf32>
    %2 = tpu.matmul %0, %1, %cst {dimension_numbers = #tpu.dot_dimension_numbers<[1], [0], [0], [1], [0, 0, 1, 1], [], []>} : vector<256x32xbf16>, vector<32x128xbf16>, vector<256x128xf32> -> vector<256x128xf32>
    %c0_3 = arith.constant 0 : index
    %c0_4 = arith.constant 0 : index
    %3 = vector.load %arg3[%c0_3, %c0_4] : memref<1x128xf32, #tpu.memory_space<vmem>>, vector<1x128xf32>
    %4 = vector.broadcast %3 : vector<1x128xf32> to vector<256x128xf32>
    %5 = arith.addf %2, %4 : vector<256x128xf32>
    %cst_5 = arith.constant 0.000000e+00 : f32
    %6 = vector.broadcast %cst_5 : f32 to vector<256x128xf32>
    %7 = arith.maximumf %5, %6 : vector<256x128xf32>
    %c0_6 = arith.constant 0 : index
    %c0_7 = arith.constant 0 : index
    %8 = vector.load %arg4[%c0_6, %c0_7] : memref<1x128xbf16, #tpu.memory_space<vmem>>, vector<1x128xbf16>
    %9 = arith.truncf %7 : vector<256x128xf32> to vector<256x128xbf16>
    %cst_8 = arith.constant dense<0.000000e+00> : vector<1x256xf32>
    %10 = tpu.matmul %8, %9, %cst_8 {dimension_numbers = #tpu.dot_dimension_numbers<[1], [1], [0], [0], [0, 0, 1, 0], [], []>} : vector<1x128xbf16>, vector<256x128xbf16>, vector<1x256xf32> -> vector<1x256xf32>
    %c0_9 = arith.constant 0 : index
    %c0_10 = arith.constant 0 : index
    %11 = memref.load %arg5[%c0_9, %c0_10] : memref<1x1xf32, #tpu.memory_space<smem>>
    %12 = vector.broadcast %11 : f32 to vector<1x256xf32>
    %13 = arith.addf %10, %12 : vector<1x256xf32>
    %c0_11 = arith.constant 0 : index
    %c0_12 = arith.constant 0 : index
    %14 = vector.load %arg6[%c0_11, %c0_12] : memref<1x256xf32, #tpu.memory_space<vmem>>, vector<1x256xf32>
    tpu.vector_store %arg6[%c0_11, %c0_12], %13 {strides = array<i32>} : memref<1x256xf32, #tpu.memory_space<vmem>>, vector<1x256xf32>,
    return
  }
  func.func @transform_0(%arg0: i32) -> (i32, i32) {
    %c0_i32 = arith.constant 0 : i32
    %c0_i32_0 = arith.constant 0 : i32
    return %arg0, %c0_i32 : i32, i32
  }
  func.func @transform_1(%arg0: i32) -> (i32, i32) {
    %c0_i32 = arith.constant 0 : i32
    %c0_i32_0 = arith.constant 0 : i32
    %c0_i32_1 = arith.constant 0 : i32
    return %c0_i32, %c0_i32_0 : i32, i32
  }
  func.func @transform_2(%arg0: i32) -> (i32, i32) {
    %c0_i32 = arith.constant 0 : i32
    %c0_i32_0 = arith.constant 0 : i32
    %c0_i32_1 = arith.constant 0 : i32
    return %c0_i32, %c0_i32_0 : i32, i32
  }
  func.func @transform_3(%arg0: i32) -> (i32, i32) {
    %c0_i32 = arith.constant 0 : i32
    %c0_i32_0 = arith.constant 0 : i32
    %c0_i32_1 = arith.constant 0 : i32
    return %c0_i32, %c0_i32_0 : i32, i32
  }
  func.func @transform_4(%arg0: i32) -> (i32, i32) {
    %c0_i32 = arith.constant 0 : i32
    %c0_i32_0 = arith.constant 0 : i32
    %c0_i32_1 = arith.constant 0 : i32
    return %c0_i32, %c0_i32_0 : i32, i32
  }
  func.func @transform_5(%arg0: i32) -> (i32, i32) {
    %c0_i32 = arith.constant 0 : i32
    %c0_i32_0 = arith.constant 0 : i32
    return %c0_i32, %arg0 : i32, i32
  }
}

</mosaic_0001>

<llo_original>
// kernel: tpu_custom_call.1
$region0: #{tpu_custom_call.1}
  #allocation0 [shape = 'u32[]', space=smem, size = 0x4, offset = 0x4, fixed_abs, tag = 'smem constant byte address 0x4 - core index']
  #allocation1 [shape = 'u32[144,128]{1,0:T(1,128)}', space=vmem, size = 0x12000, scoped, tag = 'internal scratch']
  #allocation2 [shape = 'f32[1,1]{1,0:T(1,128)S(6)}', space=smem, size = 0x200, scoped, tag = 'scoped memory for tpu_custom_call.1']
  %s0 = inlined_call_operand.vmem [shape: bf16[256,32], index: 0, kind: input, shape index: {}]
  %s1 = inlined_call_operand.vmem [shape: bf16[32,128], index: 1, kind: input, shape index: {}]
  %s2 = inlined_call_operand.vmem [shape: f32[1,128], index: 2, kind: input, shape index: {}]
  %s3 = inlined_call_operand.vmem [shape: bf16[1,128], index: 3, kind: input, shape index: {}]
  %s4 = inlined_call_operand.<no memory space> [shape: f32[1,1], index: 4, kind: input, shape index: {}]
  %s5 = inlined_call_operand.hbm [shape: f32[1,256], index: 5, kind: output, shape index: {}]
  %s6 = sld [smem:[#allocation0]]
  $region30: #{tpu_custom_call.1} parent=0
    _
  %s8 = ssub.s32 1, %s6
  %s9 = scalar_select 0, %s8, %s6
  %10 = sst [smem:[#allocation2]] %s4
  $region1: #{tpu_custom_call.1} parent=0
    #allocation3 [shape = 'u8[1024]{0}', space=vmem, size = 0x400, scoped, tag = 'output window, operand 0, single buffered']
    #allocation4 [shape = 's32[1]{0}', space=sflag, size = 0x4, scoped, tag = 'scoped memory for tpu_custom_call.1']
    %11 = vsyncpa [#allocation4], 0
    // Predicated region
    $region2: #{tpu_custom_call.1} parent=1 // pred_check
      _
    $region3: #{tpu_custom_call.1} parent=1 // pred_check_branch
      %13 = sbr.rel (0) target = $region5
    $region4: #{tpu_custom_call.1} parent=1 // pred_region
      _
    $region5: #{tpu_custom_call.1} parent=1 // pred_fallthru
      _
    // Predicated region
    $region6: #{tpu_custom_call.1} parent=1 // pred_check
      _
    $region7: #{tpu_custom_call.1} parent=1 // pred_check_branch
      %15 = sbr.rel (0) target = $region9
    $region8: #{tpu_custom_call.1} parent=1 // pred_region
      _
    $region9: #{tpu_custom_call.1} parent=1 // pred_fallthru
      _
    // Predicated region
    $region10: #{tpu_custom_call.1} parent=1 // pred_check
      _
    $region11: #{tpu_custom_call.1} parent=1 // pred_check_branch
      %17 = sbr.rel (0) target = $region13
    $region12: #{tpu_custom_call.1} parent=1 // pred_region
      _
    $region13: #{tpu_custom_call.1} parent=1 // pred_fallthru
      _
    // Predicated region
    $region14: #{tpu_custom_call.1} parent=1 // pred_check
      _
    $region15: #{tpu_custom_call.1} parent=1 // pred_check_branch
      %19 = sbr.rel (0) target = $region17
    $region16: #{tpu_custom_call.1} parent=1 // pred_region
      _
    $region17: #{tpu_custom_call.1} parent=1 // pred_fallthru
      _
    // Predicated region
    $region18: #{tpu_custom_call.1} parent=1 // pred_check
      _
    $region19: #{tpu_custom_call.1} parent=1 // pred_check_branch
      %21 = sbr.rel (0) target = $region21
    $region20: #{tpu_custom_call.1} parent=1 // pred_region
      _
    $region21: #{tpu_custom_call.1} parent=1 // pred_fallthru
      _
    %v23 = vld [vmem:[%s0] sm:$0xf]
    %v24 = vld [vmem:[%s0 + $0x4] sm:$0xf]
    %v25 = vld [vmem:[%s0 + $0x8] sm:$0xf]
    %v26 = vld [vmem:[%s0 + $0xc] sm:$0xf]
    %v27 = vld [vmem:[%s0 + $0x10] sm:$0xf]
    %v28 = vld [vmem:[%s0 + $0x14] sm:$0xf]
    %v29 = vld [vmem:[%s0 + $0x18] sm:$0xf]
    %v30 = vld [vmem:[%s0 + $0x1c] sm:$0xf]
    %v31 = vld [vmem:[%s0 + $0x20] sm:$0xf]
    %v32 = vld [vmem:[%s0 + $0x24] sm:$0xf]
    %v33 = vld [vmem:[%s0 + $0x28] sm:$0xf]
    %v34 = vld [vmem:[%s0 + $0x2c] sm:$0xf]
    %v35 = vld [vmem:[%s0 + $0x30] sm:$0xf]
    %v36 = vld [vmem:[%s0 + $0x34] sm:$0xf]
    %v37 = vld [vmem:[%s0 + $0x38] sm:$0xf]
    %v38 = vld [vmem:[%s0 + $0x3c] sm:$0xf]
    %v39 = vld [vmem:[%s0 + $0x40] sm:$0xf]
    %v40 = vld [vmem:[%s0 + $0x44] sm:$0xf]
    %v41 = vld [vmem:[%s0 + $0x48] sm:$0xf]
    %v42 = vld [vmem:[%s0 + $0x4c] sm:$0xf]
    %v43 = vld [vmem:[%s0 + $0x50] sm:$0xf]
    %v44 = vld [vmem:[%s0 + $0x54] sm:$0xf]
    %v45 = vld [vmem:[%s0 + $0x58] sm:$0xf]
    %v46 = vld [vmem:[%s0 + $0x5c] sm:$0xf]
    %v47 = vld [vmem:[%s0 + $0x60] sm:$0xf]
    %v48 = vld [vmem:[%s0 + $0x64] sm:$0xf]
    %v49 = vld [vmem:[%s0 + $0x68] sm:$0xf]
    %v50 = vld [vmem:[%s0 + $0x6c] sm:$0xf]
    %v51 = vld [vmem:[%s0 + $0x70] sm:$0xf]
    %v52 = vld [vmem:[%s0 + $0x74] sm:$0xf]
    %v53 = vld [vmem:[%s0 + $0x78] sm:$0xf]
    %v54 = vld [vmem:[%s0 + $0x7c] sm:$0xf]
    %v55 = vld [vmem:[%s1] sm:$0xf]
    %v56 = vld [vmem:[%s1 + $0x4] sm:$0xf]
    %v57 = vld [vmem:[%s1 + $0x8] sm:$0xf]
    %v58 = vld [vmem:[%s1 + $0xc] sm:$0xf]
    %v59 = vld [vmem:[%s2] sm:$0x1]
    %v61 = vlaneseq
    %v62 = vshrl.u32 %v61, 7
    %v63 = vsub.s32 0, %v62
    %v64 = vrot.slane %v59, %v63
    %v98 = vunpack.c.l.b16 %v23
    %v99 = vunpack.c.l.b16 %v24
    %v100 = vunpack.c.l.b16 %v25
    %v101 = vunpack.c.l.b16 %v26
    %v102 = vunpack.c.l.b16 %v27
    %v103 = vunpack.c.l.b16 %v28
    %v104 = vunpack.c.l.b16 %v29
    %v105 = vunpack.c.l.b16 %v30
    %v106 = vunpack.c.l.b16 %v31
    %v107 = vunpack.c.l.b16 %v32
    %v108 = vunpack.c.l.b16 %v33
    %v109 = vunpack.c.l.b16 %v34
    %v110 = vunpack.c.l.b16 %v35
    %v111 = vunpack.c.l.b16 %v36
    %v112 = vunpack.c.l.b16 %v37
    %v113 = vunpack.c.l.b16 %v38
    %v114 = vunpack.c.l.b16 %v39
    %v115 = vunpack.c.l.b16 %v40
    %v116 = vunpack.c.l.b16 %v41
    %v117 = vunpack.c.l.b16 %v42
    %v118 = vunpack.c.l.b16 %v43
    %v119 = vunpack.c.l.b16 %v44
    %v120 = vunpack.c.l.b16 %v45
    %v121 = vunpack.c.l.b16 %v46
    %v122 = vunpack.c.l.b16 %v47
    %v123 = vunpack.c.l.b16 %v48
    %v124 = vunpack.c.l.b16 %v49
    %v125 = vunpack.c.l.b16 %v50
    %v126 = vunpack.c.l.b16 %v51
    %v127 = vunpack.c.l.b16 %v52
    %v128 = vunpack.c.l.b16 %v53
    %v129 = vunpack.c.l.b16 %v54
    %v130 = vpack.c.b16 %v99, %v98
    %v131 = vpack.c.b16 %v101, %v100
    %v132 = vpack.c.b16 %v103, %v102
    %v133 = vpack.c.b16 %v105, %v104
    %v134 = vpack.c.b16 %v107, %v106
    %v135 = vpack.c.b16 %v109, %v108
    %v136 = vpack.c.b16 %v111, %v110
    %v137 = vpack.c.b16 %v113, %v112
    %v138 = vpack.c.b16 %v115, %v114
    %v139 = vpack.c.b16 %v117, %v116
    %v140 = vpack.c.b16 %v119, %v118
    %v141 = vpack.c.b16 %v121, %v120
    %v142 = vpack.c.b16 %v123, %v122
    %v143 = vpack.c.b16 %v125, %v124
    %v144 = vpack.c.b16 %v127, %v126
    %v145 = vpack.c.b16 %v129, %v128
    %v150 = vunpack.c.l.b16 %v55
    %v151 = vunpack.c.l.b16 %v56
    %v152 = vunpack.c.l.b16 %v57
    %v153 = vunpack.c.l.b16 %v58
    %v154 = vpack.c.b16 %v151, %v150
    %v155 = vpack.c.b16 %v153, %v152
    %vm158 = vcmask 261120
    %v160 = vsel %vm158, %v130, 0
    %v163 = vsel %vm158, %v131, 0
    %v166 = vsel %vm158, %v132, 0
    %v169 = vsel %vm158, %v133, 0
    %v172 = vsel %vm158, %v134, 0
    %v175 = vsel %vm158, %v135, 0
    %v178 = vsel %vm158, %v136, 0
    %v181 = vsel %vm158, %v137, 0
    %v184 = vsel %vm158, %v138, 0
    %v187 = vsel %vm158, %v139, 0
    %v190 = vsel %vm158, %v140, 0
    %v193 = vsel %vm158, %v141, 0
    %v196 = vsel %vm158, %v142, 0
    %v199 = vsel %vm158, %v143, 0
    %v202 = vsel %vm158, %v144, 0
    %v205 = vsel %vm158, %v145, 0
    %207 = vmatprep.subr.bf16.mxu0 0
    %208 = vmatpush1.bf16.msra.mxu0 0
    %209 = vmatprep.subr.bf16.mxu0 0
    %210 = vmatpush1.bf16.msra.mxu0 0
    %211 = vmatprep.subr.bf16.mxu0 0
    %212 = vmatpush1.bf16.msra.mxu0 0
    %213 = vmatprep.subr.bf16.mxu0 0
    %214 = vmatpush1.bf16.msra.mxu0 0
    %215 = vmatprep.subr.bf16.mxu0 0
    %216 = vmatpush1.bf16.msra.mxu0 0
    %217 = vmatprep.subr.bf16.mxu0 0
    %218 = vmatpush1.bf16.msra.mxu0 0
    %219 = vmatprep.subr.bf16.mxu0 0
    %220 = vmatpush1.bf16.msra.mxu0 %v155
    %221 = vmatprep.subr.bf16.mxu0 0
    %222 = vmatpush1.bf16.msra.mxu0 %v154
    %223 = vmatprep.subr.bf16.mxu0 0
    %224 = vmatpush2.bf16.msra.mxu0 0
    %225 = vmatprep.subr.bf16.mxu0 0
    %226 = vmatpush2.bf16.msra.mxu0 0
    %227 = vmatprep.subr.bf16.mxu0 0
    %228 = vmatpush2.bf16.msra.mxu0 0
    %229 = vmatprep.subr.bf16.mxu0 0
    %230 = vmatpush2.bf16.msra.mxu0 0
    %231 = vmatprep.subr.bf16.mxu0 0
    %232 = vmatpush2.bf16.msra.mxu0 0
    %233 = vmatprep.subr.bf16.mxu0 0
    %234 = vmatpush2.bf16.msra.mxu0 0
    %235 = vmatprep.subr.bf16.mxu0 0
    %236 = vmatpush2.bf16.msra.mxu0 0
    %237 = vmatprep.subr.bf16.mxu0 0
    %238 = vmatpush2.bf16.msra.mxu0 0
    %239 = vmatprep.mubr.bf16.mxu0 0
    %240 = vmatmul.mubr.bf16.gmra.mxu0 %v160
    %v241 = vpop.f32.mrf.mxu0
    %v242 = vadd.f32 %v64, %v241
    %v243 = vpop.f32.mrf.mxu0
    %v244 = vpop.f32.mrf.mxu0
    %v245 = vadd.f32 %v64, %v244
    %v246 = vpop.f32.mrf.mxu0
    %247 = vmatprep.mubr.bf16.mxu0 0
    %248 = vmatmul.mubr.bf16.gmra.mxu0 %v163
    %v249 = vpop.f32.mrf.mxu0
    %v250 = vadd.f32 %v64, %v249
    %v251 = vpop.f32.mrf.mxu0
    %v252 = vpop.f32.mrf.mxu0
    %v253 = vadd.f32 %v64, %v252
    %v254 = vpop.f32.mrf.mxu0
    %255 = vmatprep.mubr.bf16.mxu0 0
    %256 = vmatmul.mubr.bf16.gmra.mxu0 %v166
    %v257 = vpop.f32.mrf.mxu0
    %v258 = vadd.f32 %v64, %v257
    %v259 = vpop.f32.mrf.mxu0
    %v260 = vpop.f32.mrf.mxu0
    %v261 = vadd.f32 %v64, %v260
    %v262 = vpop.f32.mrf.mxu0
    %263 = vmatprep.mubr.bf16.mxu0 0
    %264 = vmatmul.mubr.bf16.gmra.mxu0 %v169
    %v265 = vpop.f32.mrf.mxu0
    %v266 = vadd.f32 %v64, %v265
    %v267 = vpop.f32.mrf.mxu0
    %v268 = vpop.f32.mrf.mxu0
    %v269 = vadd.f32 %v64, %v268
    %v270 = vpop.f32.mrf.mxu0
    %271 = vmatprep.mubr.bf16.mxu0 0
    %272 = vmatmul.mubr.bf16.gmra.mxu0 %v172
    %v273 = vpop.f32.mrf.mxu0
    %v274 = vadd.f32 %v64, %v273
    %v275 = vpop.f32.mrf.mxu0
    %v276 = vpop.f32.mrf.mxu0
    %v277 = vadd.f32 %v64, %v276
    %v278 = vpop.f32.mrf.mxu0
    %279 = vmatprep.mubr.bf16.mxu0 0
    %280 = vmatmul.mubr.bf16.gmra.mxu0 %v175
    %v281 = vpop.f32.mrf.mxu0
    %v282 = vadd.f32 %v64, %v281
    %v283 = vpop.f32.mrf.mxu0
    %v284 = vpop.f32.mrf.mxu0
    %v285 = vadd.f32 %v64, %v284
    %v286 = vpop.f32.mrf.mxu0
    %287 = vmatprep.mubr.bf16.mxu0 0
    %288 = vmatmul.mubr.bf16.gmra.mxu0 %v178
    %v289 = vpop.f32.mrf.mxu0
    %v290 = vadd.f32 %v64, %v289
    %v291 = vpop.f32.mrf.mxu0
    %v292 = vpop.f32.mrf.mxu0
    %v293 = vadd.f32 %v64, %v292
    %v294 = vpop.f32.mrf.mxu0
    %295 = vmatprep.mubr.bf16.mxu0 0
    %296 = vmatmul.mubr.bf16.gmra.mxu0 %v181
    %v297 = vpop.f32.mrf.mxu0
    %v298 = vadd.f32 %v64, %v297
    %v299 = vpop.f32.mrf.mxu0
    %v300 = vpop.f32.mrf.mxu0
    %v301 = vadd.f32 %v64, %v300
    %v302 = vpop.f32.mrf.mxu0
    %303 = vmatprep.mubr.bf16.mxu0 0
    %304 = vmatmul.mubr.bf16.gmra.mxu0 %v184
    %v305 = vpop.f32.mrf.mxu0
    %v306 = vadd.f32 %v64, %v305
    %v307 = vpop.f32.mrf.mxu0
    %v308 = vpop.f32.mrf.mxu0
    %v309 = vadd.f32 %v64, %v308
    %v310 = vpop.f32.mrf.mxu0
    %311 = vmatprep.mubr.bf16.mxu0 0
    %312 = vmatmul.mubr.bf16.gmra.mxu0 %v187
    %v313 = vpop.f32.mrf.mxu0
    %v314 = vadd.f32 %v64, %v313
    %v315 = vpop.f32.mrf.mxu0
    %v316 = vpop.f32.mrf.mxu0
    %v317 = vadd.f32 %v64, %v316
    %v318 = vpop.f32.mrf.mxu0
    %319 = vmatprep.mubr.bf16.mxu0 0
    %320 = vmatmul.mubr.bf16.gmra.mxu0 %v190
    %v321 = vpop.f32.mrf.mxu0
    %v322 = vadd.f32 %v64, %v321
    %v323 = vpop.f32.mrf.mxu0
    %v324 = vpop.f32.mrf.mxu0
    %v325 = vadd.f32 %v64, %v324
    %v326 = vpop.f32.mrf.mxu0
    %327 = vmatprep.mubr.bf16.mxu0 0
    %328 = vmatmul.mubr.bf16.gmra.mxu0 %v193
    %v329 = vpop.f32.mrf.mxu0
    %v330 = vadd.f32 %v64, %v329
    %v331 = vpop.f32.mrf.mxu0
    %v332 = vpop.f32.mrf.mxu0
    %v333 = vadd.f32 %v64, %v332
    %v334 = vpop.f32.mrf.mxu0
    %335 = vmatprep.mubr.bf16.mxu0 0
    %336 = vmatmul.mubr.bf16.gmra.mxu0 %v196
    %v337 = vpop.f32.mrf.mxu0
    %v338 = vadd.f32 %v64, %v337
    %v339 = vpop.f32.mrf.mxu0
    %v340 = vpop.f32.mrf.mxu0
    %v341 = vadd.f32 %v64, %v340
    %v342 = vpop.f32.mrf.mxu0
    %343 = vmatprep.mubr.bf16.mxu0 0
    %344 = vmatmul.mubr.bf16.gmra.mxu0 %v199
    %v345 = vpop.f32.mrf.mxu0
    %v346 = vadd.f32 %v64, %v345
    %v347 = vpop.f32.mrf.mxu0
    %v348 = vpop.f32.mrf.mxu0
    %v349 = vadd.f32 %v64, %v348
    %v350 = vpop.f32.mrf.mxu0
    %351 = vmatprep.mubr.bf16.mxu0 0
    %352 = vmatmul.mubr.bf16.gmra.mxu0 %v202
    %v353 = vpop.f32.mrf.mxu0
    %v354 = vadd.f32 %v64, %v353
    %v355 = vpop.f32.mrf.mxu0
    %v356 = vpop.f32.mrf.mxu0
    %v357 = vadd.f32 %v64, %v356
    %v358 = vpop.f32.mrf.mxu0
    %359 = vmatprep.mubr.bf16.mxu0 0
    %360 = vmatmul.mubr.bf16.gmra.mxu0 %v205
    %v361 = vpop.f32.mrf.mxu0
    %v362 = vadd.f32 %v64, %v361
    %v363 = vpop.f32.mrf.mxu0
    %v364 = vpop.f32.mrf.mxu0
    %v365 = vadd.f32 %v64, %v364
    %v366 = vpop.f32.mrf.mxu0
    %367 = vdwg.mxu0
    %v368 = vmax.f32 %v242, 0.0
    %v369 = vmax.f32 %v245, 0.0
    %v370 = vmax.f32 %v250, 0.0
    %v371 = vmax.f32 %v253, 0.0
    %v372 = vmax.f32 %v258, 0.0
    %v373 = vmax.f32 %v261, 0.0
    %v374 = vmax.f32 %v266, 0.0
    %v375 = vmax.f32 %v269, 0.0
    %v376 = vmax.f32 %v274, 0.0
    %v377 = vmax.f32 %v277, 0.0
    %v378 = vmax.f32 %v282, 0.0
    %v379 = vmax.f32 %v285, 0.0
    %v380 = vmax.f32 %v290, 0.0
    %v381 = vmax.f32 %v293, 0.0
    %v382 = vmax.f32 %v298, 0.0
    %v383 = vmax.f32 %v301, 0.0
    %v384 = vmax.f32 %v306, 0.0
    %v385 = vmax.f32 %v309, 0.0
    %v386 = vmax.f32 %v314, 0.0
    %v387 = vmax.f32 %v317, 0.0
    %v388 = vmax.f32 %v322, 0.0
    %v389 = vmax.f32 %v325, 0.0
    %v390 = vmax.f32 %v330, 0.0
    %v391 = vmax.f32 %v333, 0.0
    %v392 = vmax.f32 %v338, 0.0
    %v393 = vmax.f32 %v341, 0.0
    %v394 = vmax.f32 %v346, 0.0
    %v395 = vmax.f32 %v349, 0.0
    %v396 = vmax.f32 %v354, 0.0
    %v397 = vmax.f32 %v357, 0.0
    %v398 = vmax.f32 %v362, 0.0
    %v399 = vmax.f32 %v365, 0.0
    %v400 = vld [vmem:[%s3] sm:$0x1]
    %v401 = vpack.c.bf16 %v369, %v368
    %v402 = vpack.c.bf16 %v371, %v370
    %v403 = vpack.c.bf16 %v373, %v372
    %v404 = vpack.c.bf16 %v375, %v374
    %v405 = vpack.c.bf16 %v377, %v376
    %v406 = vpack.c.bf16 %v379, %v378
    %v407 = vpack.c.bf16 %v381, %v380
    %v408 = vpack.c.bf16 %v383, %v382
    %v409 = vpack.c.bf16 %v385, %v384
    %v410 = vpack.c.bf16 %v387, %v386
    %v411 = vpack.c.bf16 %v389, %v388
    %v412 = vpack.c.bf16 %v391, %v390
    %v413 = vpack.c.bf16 %v393, %v392
    %v414 = vpack.c.bf16 %v395, %v394
    %v415 = vpack.c.bf16 %v397, %v396
    %v416 = vpack.c.bf16 %v399, %v398
    %s417 = sld [smem:[#allocation2]]
    %v418 = vstv %s417
    %419 = vmatprep.subr.bf16.mxu0 0
    %420 = vmatpush1.bf16.xpose.msra.mxu0 %v408
    %421 = vmatprep.subr.bf16.mxu0 0
    %422 = vmatpush1.bf16.xpose.msra.mxu0 %v407
    %423 = vmatprep.subr.bf16.mxu0 0
    %424 = vmatpush1.bf16.xpose.msra.mxu0 %v406
    %425 = vmatprep.subr.bf16.mxu0 0
    %426 = vmatpush1.bf16.xpose.msra.mxu0 %v405
    %427 = vmatprep.subr.bf16.mxu0 0
    %428 = vmatpush1.bf16.xpose.msra.mxu0 %v404
    %429 = vmatprep.subr.bf16.mxu0 0
    %430 = vmatpush1.bf16.xpose.msra.mxu0 %v403
    %431 = vmatprep.subr.bf16.mxu0 0
    %432 = vmatpush1.bf16.xpose.msra.mxu0 %v402
    %433 = vmatprep.subr.bf16.mxu0 0
    %434 = vmatpush1.bf16.xpose.msra.mxu0 %v401
    %435 = vmatprep.subr.bf16.mxu0 0
    %436 = vmatpush2.bf16.xpose.msra.mxu0 %v416
    %437 = vmatprep.subr.bf16.mxu0 0
    %438 = vmatpush2.bf16.xpose.msra.mxu0 %v415
    %439 = vmatprep.subr.bf16.mxu0 0
    %440 = vmatpush2.bf16.xpose.msra.mxu0 %v414
    %441 = vmatprep.subr.bf16.mxu0 0
    %442 = vmatpush2.bf16.xpose.msra.mxu0 %v413
    %443 = vmatprep.subr.bf16.mxu0 0
    %444 = vmatpush2.bf16.xpose.msra.mxu0 %v412
    %445 = vmatprep.subr.bf16.mxu0 0
    %446 = vmatpush2.bf16.xpose.msra.mxu0 %v411
    %447 = vmatprep.subr.bf16.mxu0 0
    %448 = vmatpush2.bf16.xpose.msra.mxu0 %v410
    %449 = vmatprep.subr.bf16.mxu0 0
    %450 = vmatpush2.bf16.xpose.msra.mxu0 %v409
    %451 = vmatprep.mubr.bf16.mxu0 0
    %452 = vmatmul.mubr.bf16.gmra.mxu0 %v400
    %v453 = vpop.f32.mrf.mxu0
    %v454 = vadd.f32 %v418, %v453
    %v455 = vpop.f32.mrf.mxu0
    %v456 = vadd.f32 %v418, %v455
    %v457 = vpop.f32.mrf.mxu0
    %v458 = vpop.f32.mrf.mxu0
    %459 = vdwg.mxu0
    %v462 = vcombine.low %v454, %v456
    %v464 = vunpack.c.l.s4 1966171168
    %v465 = vunpack.c.0.s8 %v464
    %v466 = vlaneseq
    %v467 = vshrl.u32 %v466, 7
    %v468 = vsub.s32 %v465, %v467
    %v469 = vrot.slane %v462, %v468
    %v471 = vunpack.c.l.s4 1966171168
    %v472 = vunpack.c.0.s8 %v471
    %v473 = vlaneseq
    %v474 = vshrl.u32 %v473, 7
    %v475 = vsub.s32 %v472, %v474
    %v476 = vrot.slane %v469, %v475
    %v478 = vlaneseq
    %vm479 = vcmp.ge.s32.totalorder %v478, 0
    %vm480 = vcmp.lt.s32.totalorder %v478, 256
    %vm481 = vmand %vm479, %vm480
    %482 = vst.msk [vmem:[#allocation3] sm:$0x3] %vm481, %v476
    // Predicated region
    $region22: #{tpu_custom_call.1} parent=1 // pred_check
      _
    $region23: #{tpu_custom_call.1} parent=1 // pred_check_branch
      %484 = sbr.rel (0) target = $region25
    $region24: #{tpu_custom_call.1} parent=1 // pred_region
      %s486 = ssub.s32 32, 32
      %487 = vsyncadd [#allocation4], %s486
      %s489 = sshll.u32 [#allocation3], 4
      %s490 = int_to_ptr.vmem [resolvable:$true] %s489
      %492 = dma.vmem_to_hbm [thread:$0]  %s490, 32, %s5, [#allocation4]
    $region25: #{tpu_custom_call.1} parent=1 // pred_fallthru
      _
    // Predicated region
    $region26: #{tpu_custom_call.1} parent=1 // pred_check
      _
    $region27: #{tpu_custom_call.1} parent=1 // pred_check_branch
      %494 = sbr.rel (0) target = $region29
    $region28: #{tpu_custom_call.1} parent=1 // pred_region
      %495 = dma.done [#allocation4], 32
    $region29: #{tpu_custom_call.1} parent=1 // pred_fallthru
      _
    %496 = vsyncpa [#allocation4], 1

</llo_original>
